<compile_context>
chip_gen: v7x
topology: tpu7x:2x2x1
jax: 0.10.0
libtpu: 0.0.40
codegen_flags: <defaults>
</compile_context>

<pallas_src>
import jax
import jax.numpy as jnp
from jax.experimental import pallas as pl
from jax.experimental.pallas import tpu as pltpu

NUM_STRIPES = 6
BN_EPS = 1e-5


def ts_stripe_kernel(feat_ref, w1_ref, b1_ref, w2_ref, b2_ref, out_ref, max_sc):
    # feat_ref: (N, hw_tile, C_in)  bf16 channels-last backbone feature tile
    # w1_ref:   (1, C_in, C_mid)    bf16, conv1 1x1 weight (BN1 scale folded in)
    # b1_ref:   (1, 1, C_mid)       f32, folded conv1 bias + BN1 shift
    # w2_ref:   (1, C_mid, C_mid)   bf16, conv2 1x1 weight (BN2 scale folded in)
    # b2_ref:   (1, 1, C_mid)       f32
    # out_ref:  (1, N, C_mid)       f32, resident across the hw-tile axis
    # max_sc:   (N, C_mid)          f32 running spatial max (global max-pool)
    t = pl.program_id(1)

    @pl.when(t == 0)
    def _():
        max_sc[...] = jnp.full(max_sc.shape, -jnp.inf, max_sc.dtype)

    n, hwt, c_in = feat_ref.shape
    c_mid = w1_ref.shape[-1]

    # Conv1x1 (+ folded BN scale) as a row-wise matmul on this spatial tile.
    # hwt is a multiple of 8 and c_in/c_mid multiples of 128, so the reshapes
    # are free sublane regroupings (no VMEM copy).
    feat2d = feat_ref[...].reshape(n * hwt, c_in)
    h = jnp.dot(feat2d, w1_ref[0], preferred_element_type=jnp.float32)
    h = jnp.maximum(h + b1_ref[0], 0.0)                       # bias + ReLU (f32)

    # Streaming global max-pool over the spatial axis.
    tile_max = jnp.max(h.reshape(n, hwt, c_mid), axis=1)      # (N, C_mid)
    max_sc[...] = jnp.maximum(max_sc[...], tile_max)

    # Epilogue (last spatial tile only): conv2 1x1 + bias + ReLU on the pooled
    # 1x1 features, batched over the whole batch in one small matmul.
    @pl.when(t == pl.num_programs(1) - 1)
    def _():
        pooled = max_sc[...]                                  # (N, C_mid) f32
        g = jnp.dot(pooled.astype(w2_ref.dtype), w2_ref[0],
                    preferred_element_type=jnp.float32)
        g = jnp.maximum(g + b2_ref[0], 0.0)
        out_ref[0] = g.astype(out_ref.dtype)


def _pick_hw_tile(hw, max_rows_per_tile):
    """Largest multiple-of-8 divisor of hw that is <= max_rows_per_tile."""
    if hw % 8 != 0:
        return hw  # fall back to a single full block
    best = 8
    t = 8
    while t <= min(hw, max_rows_per_tile):
        if hw % t == 0:
            best = t
        t += 8
    return best


def ts_forward(feat_nchw, params, *, max_rows_per_tile=512):
    """TS stripe branch. Returns a list of NUM_STRIPES (N, C_mid) arrays."""
    n, c_in, h, w = feat_nchw.shape
    hw = h * w
    hw_tile = _pick_hw_tile(hw, max_rows_per_tile)
    num_hw_tiles = hw // hw_tile

    # NCHW -> channels-last (N, HW, C_in); bf16 halves HBM traffic / VMEM.
    feat = jnp.transpose(feat_nchw, (0, 2, 3, 1)).reshape(n, hw, c_in)
    feat = feat.astype(jnp.bfloat16)

    w1, b1, w2, b2 = params
    n_stripes, _, c_mid = w1.shape

    flops = int(2 * n_stripes * (n * hw * c_in * c_mid + n * c_mid * c_mid))
    bytes_accessed = int(
        n_stripes * feat.size * feat.dtype.itemsize   # feat re-read per stripe
        + w1.size * w1.dtype.itemsize + w2.size * w2.dtype.itemsize
        + b1.size * 4 + b2.size * 4
        + n_stripes * n * c_mid * 4)

    # NOTE: at production shapes (C_in=2048, N*HW in the tens of thousands)
    # raise vmem_limit_bytes via pltpu.CompilerParams and keep hw_tile in the
    # 256-512 range on v7x (64 MiB VMEM) / 512-1024 on v5e/v6e.
    out = pl.pallas_call(
        ts_stripe_kernel,
        out_shape=jax.ShapeDtypeStruct((n_stripes, n, c_mid), jnp.float32),
        grid_spec=pltpu.PrefetchScalarGridSpec(
            num_scalar_prefetch=0,
            grid=(n_stripes, num_hw_tiles),
            in_specs=[
                pl.BlockSpec((n, hw_tile, c_in), lambda s, t: (0, t, 0)),
                pl.BlockSpec((1, c_in, c_mid), lambda s, t: (s, 0, 0)),
                pl.BlockSpec((1, 1, c_mid), lambda s, t: (s, 0, 0)),
                pl.BlockSpec((1, c_mid, c_mid), lambda s, t: (s, 0, 0)),
                pl.BlockSpec((1, 1, c_mid), lambda s, t: (s, 0, 0)),
            ],
            out_specs=pl.BlockSpec((1, n, c_mid), lambda s, t: (s, 0, 0)),
            scratch_shapes=[pltpu.VMEM((n, c_mid), jnp.float32)],
        ),
        compiler_params=pltpu.CompilerParams(
            dimension_semantics=("parallel", "arbitrary")),
        cost_estimate=pl.CostEstimate(
            flops=flops, transcendentals=0, bytes_accessed=bytes_accessed),
    )(feat, w1, b1, w2, b2)
    return [out[i] for i in range(n_stripes)]


def make_params(key, c_in, c_mid, num_stripes):
    """Synthetic weights. Returns (kernel_params_bf16, reference_params_f32).

    Eval-mode BN is folded: y = (x @ (W*s)) + ((conv_b - mean)*s + beta),
    with s = gamma / sqrt(var + eps).
    """
    ks = jax.random.split(key, 12)
    f32 = jnp.float32
    conv1_w = 0.02 * jax.random.normal(ks[0], (num_stripes, c_in, c_mid), f32)
    conv1_b = 0.01 * jax.random.normal(ks[1], (num_stripes, c_mid), f32)
    bn1_gamma = 1.0 + 0.1 * jax.random.normal(ks[2], (num_stripes, c_mid), f32)
    bn1_beta = 0.1 * jax.random.normal(ks[3], (num_stripes, c_mid), f32)
    bn1_mean = 0.1 * jax.random.normal(ks[4], (num_stripes, c_mid), f32)
    bn1_var = jnp.abs(jax.random.normal(ks[5], (num_stripes, c_mid), f32)) + 0.5

    conv2_w = 0.05 * jax.random.normal(ks[6], (num_stripes, c_mid, c_mid), f32)
    conv2_b = 0.01 * jax.random.normal(ks[7], (num_stripes, c_mid), f32)
    bn2_gamma = 1.0 + 0.1 * jax.random.normal(ks[8], (num_stripes, c_mid), f32)
    bn2_beta = 0.1 * jax.random.normal(ks[9], (num_stripes, c_mid), f32)
    bn2_mean = 0.1 * jax.random.normal(ks[10], (num_stripes, c_mid), f32)
    bn2_var = jnp.abs(jax.random.normal(ks[11], (num_stripes, c_mid), f32)) + 0.5

    s1 = bn1_gamma / jnp.sqrt(bn1_var + BN_EPS)
    b1 = (conv1_b - bn1_mean) * s1 + bn1_beta
    s2 = bn2_gamma / jnp.sqrt(bn2_var + BN_EPS)
    b2 = (conv2_b - bn2_mean) * s2 + bn2_beta

    w1_f32 = conv1_w * s1[:, None, :]
    w2_f32 = conv2_w * s2[:, None, :]
    b1 = b1[:, None, :].astype(f32)
    b2 = b2[:, None, :].astype(f32)

    kernel_params = (w1_f32.astype(jnp.bfloat16), b1,
                     w2_f32.astype(jnp.bfloat16), b2)
    ref_params = (w1_f32, b1, w2_f32, b2)
    return kernel_params, ref_params


def ts_reference(feat_nchw, ref_params):
    """Pure-JAX f32 reference of the stripe branch."""
    w1, b1, w2, b2 = ref_params
    n, c_in, h, w = feat_nchw.shape
    feat = jnp.transpose(feat_nchw, (0, 2, 3, 1)).reshape(n, h * w, c_in)
    outs = []
    for i in range(w1.shape[0]):
        hid = jnp.maximum(feat @ w1[i] + b1[i], 0.0)
        pooled = jnp.max(hid, axis=1)
        g = jnp.maximum(pooled @ w2[i] + b2[i], 0.0)
        outs.append(g)
    return outs


if __name__ == "__main__":
    # Small shapes consistent with the module structure:
    #   backbone feature map (N, C_in, H, W), 1x1 convs C_in -> C_mid.
    N, C_IN, H, W = 2, 256, 8, 8
    C_MID = 128

    key = jax.random.PRNGKey(0)
    k_feat, k_params = jax.random.split(key)
    feat = jax.random.normal(k_feat, (N, C_IN, H, W), jnp.float32)
    kernel_params, ref_params = make_params(k_params, C_IN, C_MID, NUM_STRIPES)

    # max_rows_per_tile=16 -> 4 spatial tiles per stripe, exercising the
    # streaming running-max + pl.when epilogue (production: 256-1024 rows).
    outs = ts_forward(feat, kernel_params, max_rows_per_tile=16)
    outs = [jax.block_until_ready(o) for o in outs]

    refs = ts_reference(feat, ref_params)
    for o, r in zip(outs, refs):
        assert o.shape == (N, C_MID)
        # bf16 feat/weights on the MXU (f32 accumulate) vs pure-f32 reference.
        assert jnp.allclose(o, r, atol=3e-2, rtol=3e-2), float(
            jnp.max(jnp.abs(o - r)))

    print("KERNEL_OK")
</pallas_src>

<mosaic_0001>
module attributes {stable_mosaic.version = 11 : i64} {
  func.func @ts_stripe_kernel(%arg0: i32, %arg1: i32, %arg2: memref<2x16x256xbf16, #tpu.memory_space<vmem>>, %arg3: memref<1x256x128xbf16, #tpu.memory_space<vmem>>, %arg4: memref<1x1x128xf32, #tpu.memory_space<vmem>>, %arg5: memref<1x128x128xbf16, #tpu.memory_space<vmem>>, %arg6: memref<1x1x128xf32, #tpu.memory_space<vmem>>, %arg7: memref<1x2x128xf32, #tpu.memory_space<vmem>>, %arg8: memref<2x128xf32, #tpu.memory_space<vmem>>) attributes {dimension_semantics = [#tpu.dimension_semantics<parallel>, #tpu.dimension_semantics<arbitrary>], iteration_bounds = array<i64: 6, 4>, scalar_prefetch = 0 : i64, scratch_operands = 1 : i64, tpu.core_type = #tpu.core_type<tc>, window_params = [{transform_indices = @transform_0, window_bounds = array<i64: 2, 16, 256>}, {transform_indices = @transform_1, window_bounds = array<i64: 1, 256, 128>}, {transform_indices = @transform_2, window_bounds = array<i64: 1, 1, 128>}, {transform_indices = @transform_3, window_bounds = array<i64: 1, 128, 128>}, {transform_indices = @transform_4, window_bounds = array<i64: 1, 1, 128>}, {transform_indices = @transform_5, window_bounds = array<i64: 1, 2, 128>}]} {
    %c0_i32 = arith.constant 0 : i32
    %0 = arith.cmpi eq, %arg1, %c0_i32 : i32
    %1 = arith.extui %0 : i1 to i32
    %c0_i32_0 = arith.constant 0 : i32
    %2 = arith.cmpi ne, %1, %c0_i32_0 : i32
    scf.if %2 {
      %cst_16 = arith.constant 0xFF800000 : f32
      %22 = vector.broadcast %cst_16 : f32 to vector<2x128xf32>
      %c0_17 = arith.constant 0 : index
      %c0_18 = arith.constant 0 : index
      %23 = vector.load %arg8[%c0_17, %c0_18] : memref<2x128xf32, #tpu.memory_space<vmem>>, vector<2x128xf32>
      tpu.vector_store %arg8[%c0_17, %c0_18], %22 {strides = array<i32>} : memref<2x128xf32, #tpu.memory_space<vmem>>, vector<2x128xf32>,
    } else {
    }
    %c0 = arith.constant 0 : index
    %c0_1 = arith.constant 0 : index
    %c0_2 = arith.constant 0 : index
    %3 = vector.load %arg2[%c0, %c0_1, %c0_2] : memref<2x16x256xbf16, #tpu.memory_space<vmem>>, vector<2x16x256xbf16>
    %4 = vector.shape_cast %3 : vector<2x16x256xbf16> to vector<32x256xbf16>
    %c0_3 = arith.constant 0 : index
    %c0_4 = arith.constant 0 : index
    %c0_5 = arith.constant 0 : index
    %5 = vector.load %arg3[%c0_3, %c0_4, %c0_5] : memref<1x256x128xbf16, #tpu.memory_space<vmem>>, vector<1x256x128xbf16>
    %6 = vector.shape_cast %5 : vector<1x256x128xbf16> to vector<256x128xbf16>
    %cst = arith.constant dense<0.000000e+00> : vector<32x128xf32>
    %7 = tpu.matmul %4, %6, %cst {dimension_numbers = #tpu.dot_dimension_numbers<[1], [0], [0], [1], [0, 0, 1, 1], [], []>} : vector<32x256xbf16>, vector<256x128xbf16>, vector<32x128xf32> -> vector<32x128xf32>
    %c0_6 = arith.constant 0 : index
    %c0_7 = arith.constant 0 : index
    %c0_8 = arith.constant 0 : index
    %8 = vector.load %arg4[%c0_6, %c0_7, %c0_8] : memref<1x1x128xf32, #tpu.memory_space<vmem>>, vector<1x1x128xf32>
    %9 = vector.shape_cast %8 : vector<1x1x128xf32> to vector<1x128xf32>
    %10 = vector.broadcast %9 : vector<1x128xf32> to vector<32x128xf32>
    %11 = arith.addf %7, %10 : vector<32x128xf32>
    %cst_9 = arith.constant 0.000000e+00 : f32
    %12 = vector.broadcast %cst_9 : f32 to vector<32x128xf32>
    %13 = arith.maximumf %11, %12 : vector<32x128xf32>
    %14 = vector.shape_cast %13 : vector<32x128xf32> to vector<2x16x128xf32>
    %cst_10 = arith.constant dense<0xFF800000> : vector<2x128xf32>
    %15 = vector.multi_reduction <maximumf>, %14, %cst_10 [1] : vector<2x16x128xf32> to vector<2x128xf32>
    %c0_11 = arith.constant 0 : index
    %c0_12 = arith.constant 0 : index
    %16 = vector.load %arg8[%c0_11, %c0_12] : memref<2x128xf32, #tpu.memory_space<vmem>>, vector<2x128xf32>
    %17 = arith.maximumf %16, %15 : vector<2x128xf32>
    %c0_13 = arith.constant 0 : index
    %c0_14 = arith.constant 0 : index
    %18 = vector.load %arg8[%c0_13, %c0_14] : memref<2x128xf32, #tpu.memory_space<vmem>>, vector<2x128xf32>
    tpu.vector_store %arg8[%c0_13, %c0_14], %17 {strides = array<i32>} : memref<2x128xf32, #tpu.memory_space<vmem>>, vector<2x128xf32>,
    %c3_i32 = arith.constant 3 : i32
    %19 = arith.cmpi eq, %arg1, %c3_i32 : i32
    %20 = arith.extui %19 : i1 to i32
    %c0_i32_15 = arith.constant 0 : i32
    %21 = arith.cmpi ne, %20, %c0_i32_15 : i32
    scf.if %21 {
      %c0_16 = arith.constant 0 : index
      %c0_17 = arith.constant 0 : index
      %22 = vector.load %arg8[%c0_16, %c0_17] : memref<2x128xf32, #tpu.memory_space<vmem>>, vector<2x128xf32>
      %23 = arith.truncf %22 : vector<2x128xf32> to vector<2x128xbf16>
      %c0_18 = arith.constant 0 : index
      %c0_19 = arith.constant 0 : index
      %c0_20 = arith.constant 0 : index
      %24 = vector.load %arg5[%c0_18, %c0_19, %c0_20] : memref<1x128x128xbf16, #tpu.memory_space<vmem>>, vector<1x128x128xbf16>
      %25 = vector.shape_cast %24 : vector<1x128x128xbf16> to vector<128x128xbf16>
      %cst_21 = arith.constant dense<0.000000e+00> : vector<2x128xf32>
      %26 = tpu.matmul %23, %25, %cst_21 {dimension_numbers = #tpu.dot_dimension_numbers<[1], [0], [0], [1], [0, 0, 1, 1], [], []>} : vector<2x128xbf16>, vector<128x128xbf16>, vector<2x128xf32> -> vector<2x128xf32>
      %c0_22 = arith.constant 0 : index
      %c0_23 = arith.constant 0 : index
      %c0_24 = arith.constant 0 : index
      %27 = vector.load %arg6[%c0_22, %c0_23, %c0_24] : memref<1x1x128xf32, #tpu.memory_space<vmem>>, vector<1x1x128xf32>
      %28 = vector.shape_cast %27 : vector<1x1x128xf32> to vector<1x128xf32>
      %29 = vector.broadcast %28 : vector<1x128xf32> to vector<2x128xf32>
      %30 = arith.addf %26, %29 : vector<2x128xf32>
      %cst_25 = arith.constant 0.000000e+00 : f32
      %31 = vector.broadcast %cst_25 : f32 to vector<2x128xf32>
      %32 = arith.maximumf %30, %31 : vector<2x128xf32>
      %c0_26 = arith.constant 0 : index
      %c0_27 = arith.constant 0 : index
      %c0_28 = arith.constant 0 : index
      %33 = vector.load %arg7[%c0_26, %c0_27, %c0_28] : memref<1x2x128xf32, #tpu.memory_space<vmem>>, vector<1x2x128xf32>
      %34 = vector.shape_cast %33 : vector<1x2x128xf32> to vector<2x128xf32>
      %35 = vector.shape_cast %32 : vector<2x128xf32> to vector<1x2x128xf32>
      tpu.vector_store %arg7[%c0_26, %c0_27, %c0_28], %35 {strides = array<i32>} : memref<1x2x128xf32, #tpu.memory_space<vmem>>, vector<1x2x128xf32>,
    } else {
    }
    return
  }
  func.func @transform_0(%arg0: i32, %arg1: i32) -> (i32, i32, i32) {
    %c0_i32 = arith.constant 0 : i32
    %c0_i32_0 = arith.constant 0 : i32
    %c0_i32_1 = arith.constant 0 : i32
    return %c0_i32, %arg1, %c0_i32_0 : i32, i32, i32
  }
  func.func @transform_1(%arg0: i32, %arg1: i32) -> (i32, i32, i32) {
    %c0_i32 = arith.constant 0 : i32
    %c0_i32_0 = arith.constant 0 : i32
    %c0_i32_1 = arith.constant 0 : i32
    return %arg0, %c0_i32, %c0_i32_0 : i32, i32, i32
  }
  func.func @transform_2(%arg0: i32, %arg1: i32) -> (i32, i32, i32) {
    %c0_i32 = arith.constant 0 : i32
    %c0_i32_0 = arith.constant 0 : i32
    %c0_i32_1 = arith.constant 0 : i32
    return %arg0, %c0_i32, %c0_i32_0 : i32, i32, i32
  }
  func.func @transform_3(%arg0: i32, %arg1: i32) -> (i32, i32, i32) {
    %c0_i32 = arith.constant 0 : i32
    %c0_i32_0 = arith.constant 0 : i32
    %c0_i32_1 = arith.constant 0 : i32
    return %arg0, %c0_i32, %c0_i32_0 : i32, i32, i32
  }
  func.func @transform_4(%arg0: i32, %arg1: i32) -> (i32, i32, i32) {
    %c0_i32 = arith.constant 0 : i32
    %c0_i32_0 = arith.constant 0 : i32
    %c0_i32_1 = arith.constant 0 : i32
    return %arg0, %c0_i32, %c0_i32_0 : i32, i32, i32
  }
  func.func @transform_5(%arg0: i32, %arg1: i32) -> (i32, i32, i32) {
    %c0_i32 = arith.constant 0 : i32
    %c0_i32_0 = arith.constant 0 : i32
    %c0_i32_1 = arith.constant 0 : i32
    return %arg0, %c0_i32, %c0_i32_0 : i32, i32, i32
  }
}

</mosaic_0001>

<llo_original>
// kernel: tpu_custom_call.1
$region0: #{tpu_custom_call.1}
  #allocation0 [shape = 'u32[]', space=smem, size = 0x4, offset = 0x4, fixed_abs, tag = 'smem constant byte address 0x4 - core index']
  #allocation1 [shape = 'u32[144,128]{1,0:T(1,128)}', space=vmem, size = 0x12000, scoped, tag = 'internal scratch']
  #allocation2 [shape = 'f32[2,128]{1,0:T(2,128)}', space=vmem, size = 0x400, scoped, tag = 'scratch operand']
  #allocation10 [shape = 's32[]', space=sflag, size = 0x4, offset = 0, fixed_abs, tag = 'sflag constant byte address 0x0 - dummy sync flag']
  %s0 = inlined_call_operand.hbm [shape: bf16[2,64,256], index: 0, kind: input, shape index: {}]
  %s1 = inlined_call_operand.hbm [shape: bf16[6,256,128], index: 1, kind: input, shape index: {}]
  %s2 = inlined_call_operand.vmem [shape: f32[6,1,128], index: 2, kind: input, shape index: {}]
  %s3 = inlined_call_operand.hbm [shape: bf16[6,128,128], index: 3, kind: input, shape index: {}]
  %s4 = inlined_call_operand.vmem [shape: f32[6,1,128], index: 4, kind: input, shape index: {}]
  %s5 = inlined_call_operand.hbm [shape: f32[6,2,128], index: 5, kind: output, shape index: {}]
  %s6 = sld [smem:[#allocation0]]
  $region73: #{tpu_custom_call.1} parent=0
    _
  %s8 = ssub.s32 1, %s6
  %s9 = scalar_select 0, %s8, %s6
  $region1: #{tpu_custom_call.1} parent=0
    #allocation3 [shape = 'u8[32768]{0}', space=vmem, size = 0x8000, scoped, tag = 'input window, operand 0']
    #allocation4 [shape = 's32[2]{0}', space=sflag, size = 0x8, scoped, tag = 'scoped memory for tpu_custom_call.1']
    #allocation5 [shape = 's32[2]{0}', space=sflag, size = 0x8, scoped, tag = 'scoped memory for tpu_custom_call.1']
    #allocation6 [shape = 'u8[131072]{0}', space=vmem, size = 0x20000, scoped, tag = 'input window, operand 1']
    #allocation7 [shape = 's32[2]{0}', space=sflag, size = 0x8, scoped, tag = 'scoped memory for tpu_custom_call.1']
    #allocation8 [shape = 'u8[65536]{0}', space=vmem, size = 0x10000, scoped, tag = 'input window, operand 3']
    #allocation9 [shape = 'u8[2048]{0}', space=vmem, size = 0x800, scoped, tag = 'output window, operand 0']
    %10 = vsyncpa [#allocation4], 0
    %s11 = scalar_lea.sflag [#allocation4], 1
    %12 = vsyncpa %s11, 0
    %13 = vsyncpa [#allocation7], 0
    %s14 = scalar_lea.sflag [#allocation7], 1
    %15 = vsyncpa %s14, 0
    %16 = vsyncpa [#allocation5], 0
    %s17 = scalar_lea.sflag [#allocation5], 1
    %18 = vsyncpa %s17, 0
    loop: start=0, step=1, limit=26
    $region2: #{tpu_custom_call.1} parent=1 // loop_pre_header
      _
    $region3: #{tpu_custom_call.1} parent=1 // loop_header
      %s20 = sphi 0, %s24
      %p21 = scmp.ge.s32.totalorder %s20, 26
      %s27 = sphi 0, %s39
      %s28 = sphi 0, %s35
      %s29 = sphi 0, %s27
      %s30 = sphi 0, %s28
      %s31 = sphi 0, %s29
      %s32 = sphi 0, %s30
      %s42 = sphi 0, %s44
      %s45 = sphi 0, %s42
      %s46 = sphi 0, %s45
      %s62 = sphi 0, %s46
      %s68 = sphi 0, %s70
      %s71 = sphi 0, %s68
      %s72 = sphi 0, %s71
      %s88 = sphi 0, %s72
      %s94 = sphi 0, %s96
      %s97 = sphi 0, %s94
      %s98 = sphi 0, %s97
      %s114 = sphi 0, %s98
      %s120 = sphi 0, %s122
      %s123 = sphi 0, %s120
      %s124 = sphi 0, %s123
      %s140 = sphi 0, %s124
      %s146 = sphi 0, %s148
      %s149 = sphi 0, %s146
      %s150 = sphi 0, %s149
      %s166 = sphi 0, %s150
      %s172 = sphi 0, %s174
      %s175 = sphi 0, %s172
      %s176 = sphi 0, %s175
      %s192 = sphi 0, %s176
    $region4: #{tpu_custom_call.1} parent=1 // loop_header_branch
      %23 = sbr.rel (%p21) target = $region8
    $region5: #{tpu_custom_call.1} parent=1 // loop_body
      %s25 = ssub.s32 %s20, 1
      %s26 = ssub.s32 %s20, 2
      %s33 = sadd.s32 1, %s28
      %p34 = scmp.ge.s32.totalorder %s33, 4
      %s35 = scalar_select %p34, 0, %s33
      %s36 = sadd.s32 1, %s27
      %s37 = scalar_select %p34, %s36, %s27
      %p38 = scmp.ge.s32.totalorder %s37, 6
      %s39 = scalar_select %p38, 0, %s37
      %s40 = ssub.s32 %s28, %s35
      %p41 = scmp.eq.s32.totalorder %s40, 0
      %s43 = sadd.s32 %s42, 1
      %s44 = scalar_select %p41, %s42, %s43
      %p47 = pneg %p41
      %p48 = scmp.eq.s32.totalorder %s20, 23
      %p49 = por %p47, %p48
      %p50 = scmp.ne.s32.totalorder %s42, %s45
      %p51 = scmp.eq.s32.totalorder %s20, 0
      %p52 = por %p50, %p51
      %p53 = scmp.ne.s32.totalorder %s42, %s45
      %p54 = scmp.eq.s32.totalorder %s25, 23
      %p55 = por %p53, %p54
      %p56 = scmp.ne.s32.totalorder %s45, %s46
      %p57 = scmp.eq.s32.totalorder %s25, 0
      %p58 = por %p56, %p57
      %p59 = scmp.ne.s32.totalorder %s45, %s46
      %p60 = scmp.eq.s32.totalorder %s26, 23
      %p61 = por %p59, %p60
      %p63 = scmp.ne.s32.totalorder %s46, %s62
      %p64 = scmp.eq.s32.totalorder %s26, 0
      %p65 = por %p63, %p64
      %s66 = ssub.s32 %s27, %s39
      %p67 = scmp.eq.s32.totalorder %s66, 0
      %s69 = sadd.s32 %s68, 1
      %s70 = scalar_select %p67, %s68, %s69
      %p73 = pneg %p67
      %p74 = scmp.eq.s32.totalorder %s20, 23
      %p75 = por %p73, %p74
      %p76 = scmp.ne.s32.totalorder %s68, %s71
      %p77 = scmp.eq.s32.totalorder %s20, 0
      %p78 = por %p76, %p77
      %p79 = scmp.ne.s32.totalorder %s68, %s71
      %p80 = scmp.eq.s32.totalorder %s25, 23
      %p81 = por %p79, %p80
      %p82 = scmp.ne.s32.totalorder %s71, %s72
      %p83 = scmp.eq.s32.totalorder %s25, 0
      %p84 = por %p82, %p83
      %p85 = scmp.ne.s32.totalorder %s71, %s72
      %p86 = scmp.eq.s32.totalorder %s26, 23
      %p87 = por %p85, %p86
      %p89 = scmp.ne.s32.totalorder %s72, %s88
      %p90 = scmp.eq.s32.totalorder %s26, 0
      %p91 = por %p89, %p90
      %s92 = ssub.s32 %s27, %s39
      %p93 = scmp.eq.s32.totalorder %s92, 0
      %s95 = sadd.s32 %s94, 1
      %s96 = scalar_select %p93, %s94, %s95
      %p99 = pneg %p93
      %p100 = scmp.eq.s32.totalorder %s20, 23
      %p101 = por %p99, %p100
      %p102 = scmp.ne.s32.totalorder %s94, %s97
      %p103 = scmp.eq.s32.totalorder %s20, 0
      %p104 = por %p102, %p103
      %p105 = scmp.ne.s32.totalorder %s94, %s97
      %p106 = scmp.eq.s32.totalorder %s25, 23
      %p107 = por %p105, %p106
      %p108 = scmp.ne.s32.totalorder %s97, %s98
      %p109 = scmp.eq.s32.totalorder %s25, 0
      %p110 = por %p108, %p109
      %p111 = scmp.ne.s32.totalorder %s97, %s98
      %p112 = scmp.eq.s32.totalorder %s26, 23
      %p113 = por %p111, %p112
      %p115 = scmp.ne.s32.totalorder %s98, %s114
      %p116 = scmp.eq.s32.totalorder %s26, 0
      %p117 = por %p115, %p116
      %s118 = ssub.s32 %s27, %s39
      %p119 = scmp.eq.s32.totalorder %s118, 0
      %s121 = sadd.s32 %s120, 1
      %s122 = scalar_select %p119, %s120, %s121
      %p125 = pneg %p119
      %p126 = scmp.eq.s32.totalorder %s20, 23
      %p127 = por %p125, %p126
      %p128 = scmp.ne.s32.totalorder %s120, %s123
      %p129 = scmp.eq.s32.totalorder %s20, 0
      %p130 = por %p128, %p129
      %p131 = scmp.ne.s32.totalorder %s120, %s123
      %p132 = scmp.eq.s32.totalorder %s25, 23
      %p133 = por %p131, %p132
      %p134 = scmp.ne.s32.totalorder %s123, %s124
      %p135 = scmp.eq.s32.totalorder %s25, 0
      %p136 = por %p134, %p135
      %p137 = scmp.ne.s32.totalorder %s123, %s124
      %p138 = scmp.eq.s32.totalorder %s26, 23
      %p139 = por %p137, %p138
      %p141 = scmp.ne.s32.totalorder %s124, %s140
      %p142 = scmp.eq.s32.totalorder %s26, 0
      %p143 = por %p141, %p142
      %s144 = ssub.s32 %s27, %s39
      %p145 = scmp.eq.s32.totalorder %s144, 0
      %s147 = sadd.s32 %s146, 1
      %s148 = scalar_select %p145, %s146, %s147
      %p151 = pneg %p145
      %p152 = scmp.eq.s32.totalorder %s20, 23
      %p153 = por %p151, %p152
      %p154 = scmp.ne.s32.totalorder %s146, %s149
      %p155 = scmp.eq.s32.totalorder %s20, 0
      %p156 = por %p154, %p155
      %p157 = scmp.ne.s32.totalorder %s146, %s149
      %p158 = scmp.eq.s32.totalorder %s25, 23
      %p159 = por %p157, %p158
      %p160 = scmp.ne.s32.totalorder %s149, %s150
      %p161 = scmp.eq.s32.totalorder %s25, 0
      %p162 = por %p160, %p161
      %p163 = scmp.ne.s32.totalorder %s149, %s150
      %p164 = scmp.eq.s32.totalorder %s26, 23
      %p165 = por %p163, %p164
      %p167 = scmp.ne.s32.totalorder %s150, %s166
      %p168 = scmp.eq.s32.totalorder %s26, 0
      %p169 = por %p167, %p168
      %s170 = ssub.s32 %s27, %s39
      %p171 = scmp.eq.s32.totalorder %s170, 0
      %s173 = sadd.s32 %s172, 1
      %s174 = scalar_select %p171, %s172, %s173
      %p177 = pneg %p171
      %p178 = scmp.eq.s32.totalorder %s20, 23
      %p179 = por %p177, %p178
      %p180 = scmp.ne.s32.totalorder %s172, %s175
      %p181 = scmp.eq.s32.totalorder %s20, 0
      %p182 = por %p180, %p181
      %p183 = scmp.ne.s32.totalorder %s172, %s175
      %p184 = scmp.eq.s32.totalorder %s25, 23
      %p185 = por %p183, %p184
      %p186 = scmp.ne.s32.totalorder %s175, %s176
      %p187 = scmp.eq.s32.totalorder %s25, 0
      %p188 = por %p186, %p187
      %p189 = scmp.ne.s32.totalorder %s175, %s176
      %p190 = scmp.eq.s32.totalorder %s26, 23
      %p191 = por %p189, %p190
      %p193 = scmp.ne.s32.totalorder %s176, %s192
      %p194 = scmp.eq.s32.totalorder %s26, 0
      %p195 = por %p193, %p194
      %p196 = scmp.le.s32.totalorder 1, %s20
      %p197 = scmp.lt.s32.totalorder %s20, 25
      %p198 = pnand %p196, %p197
      %p199 = pneg %p198
      // Predicated region
      $region9: #{tpu_custom_call.1} parent=5 // pred_check
        _
      $region10: #{tpu_custom_call.1} parent=5 // pred_check_branch
        %201 = sbr.rel (%p198) target = $region12
      $region11: #{tpu_custom_call.1} parent=5 // pred_region
        %s202 = ssub.s32 %s20, 1
      $region12: #{tpu_custom_call.1} parent=5 // pred_fallthru
        _
      %p203 = scmp.lt.s32.totalorder %s20, 24
      // Predicated region
      $region13: #{tpu_custom_call.1} parent=5 // pred_check
        %p204 = pneg %p203
      $region14: #{tpu_custom_call.1} parent=5 // pred_check_branch
        %206 = sbr.rel (%p204) target = $region16
      $region15: #{tpu_custom_call.1} parent=5 // pred_region
        // Predicated region
        $region17: #{tpu_custom_call.1} parent=15 // pred_check
          %p207 = pneg %p52
        $region18: #{tpu_custom_call.1} parent=15 // pred_check_branch
          %209 = sbr.rel (%p207) target = $region20
        $region19: #{tpu_custom_call.1} parent=15 // pred_region
          #allocation11 [shape = 'u32[6]{0}', space=smem, size = 0x18, scoped, tag = 'DMA stride descriptor']
          %s210 = sand.u32 %s42, 1
          %s211 = scalar_lea.sflag [#allocation4], %s210
          %s212 = sand.u32 %s42, 1
          %s213 = smul.addr %s212, 32
          %s214 = scalar_lea.vmem [#allocation3], %s213
          %s215 = smul.u32 2, %s28
          %s217 = ssub.s32 512, 512
          %218 = vsyncadd %s211, %s217
          %s219 = smul.addr %s215, 2
          %s220 = smul.addr %s219, 64
          %s221 = scalar_lea.hbm %s0, %s220
          %s223 = sshll.u32 1, 14
          %s224 = sxor.u32 4294967295, %s223
          %s226 = sld [smem:[#allocation0]]
          %s227 = sadd.s32 2, %s226
          %s229 = sshll.u32 7, 26
          %s230 = sxor.u32 4294967295, %s229
          %s231 = sand.u32 0, %s230
          %s232 = sshll.u32 %s227, 26
          %s233 = sor.u32 %s231, %s232
          %s234 = sshll.u32 %s214, 4
          %s235 = int_to_ptr.vmem [resolvable:$true] %s234
          %241 = sst [smem:[#allocation11]] 1024
          %s242 = scalar_lea.smem [#allocation11], 1
          %243 = sst [smem:[%s242]] 256
          %s244 = scalar_lea.smem [#allocation11], 2
          %245 = sst [smem:[%s244]] 2
          %s246 = scalar_lea.smem [#allocation11], 3
          %247 = sst [smem:[%s246]] 128
          %s248 = scalar_lea.smem [#allocation11], 4
          %249 = sst [smem:[%s248]] 128
          %s250 = scalar_lea.smem [#allocation11], 5
          %251 = sst [smem:[%s250]] 8
          %253 = dma.general %s221, 512, %s235, %s211, [#allocation10], [#allocation11], %s233, 0
        $region20: #{tpu_custom_call.1} parent=15 // pred_fallthru
          _
        // Predicated region
        $region21: #{tpu_custom_call.1} parent=15 // pred_check
          %p254 = pneg %p78
        $region22: #{tpu_custom_call.1} parent=15 // pred_check_branch
          %256 = sbr.rel (%p254) target = $region24
        $region23: #{tpu_custom_call.1} parent=15 // pred_region
          %s257 = sand.u32 %s20, 1
          %s258 = scalar_lea.sflag [#allocation7], %s257
          %s259 = sand.u32 %s68, 1
          %s260 = smul.addr %s259, 128
          %s261 = scalar_lea.vmem [#allocation6], %s260
          %s263 = ssub.s32 2048, 2048
          %264 = vsyncadd %s258, %s263
          %s265 = smul.addr %s27, 32
          %s266 = smul.addr %s265, 64
          %s267 = scalar_lea.hbm %s1, %s266
          %s268 = sshll.u32 %s261, 4
          %s269 = int_to_ptr.vmem [resolvable:$true] %s268
          %274 = dma.hbm_to_vmem [thread:$0]  %s267, 2048, %s269, %s258, 64, 64, 4
        $region24: #{tpu_custom_call.1} parent=15 // pred_fallthru
          _
        // Predicated region
        $region25: #{tpu_custom_call.1} parent=15 // pred_check
          %p275 = pneg %p104
        $region26: #{tpu_custom_call.1} parent=15 // pred_check_branch
          %277 = sbr.rel (%p275) target = $region28
        $region27: #{tpu_custom_call.1} parent=15 // pred_region
          %p278 = scmp.lt.s32.totalorder %s27, 5
          %s279 = scalar_select %p278, %s27, 5
          %s280 = scalar_lea.vmem %s2, %s279
        $region28: #{tpu_custom_call.1} parent=15 // pred_fallthru
          _
        // Predicated region
        $region29: #{tpu_custom_call.1} parent=15 // pred_check
          %p281 = pneg %p130
        $region30: #{tpu_custom_call.1} parent=15 // pred_check_branch
          %283 = sbr.rel (%p281) target = $region32
        $region31: #{tpu_custom_call.1} parent=15 // pred_region
          %s284 = sand.u32 %s20, 1
          %s285 = scalar_lea.sflag [#allocation7], %s284
          %s286 = sand.u32 %s120, 1
          %s287 = smul.addr %s286, 64
          %s288 = scalar_lea.vmem [#allocation8], %s287
          %s290 = ssub.s32 1024, 1024
          %291 = vsyncadd %s285, %s290
          %s292 = smul.addr %s27, 16
          %s293 = smul.addr %s292, 64
          %s294 = scalar_lea.hbm %s3, %s293
          %s295 = sshll.u32 %s288, 4
          %s296 = int_to_ptr.vmem [resolvable:$true] %s295
          %301 = dma.hbm_to_vmem [thread:$0]  %s294, 1024, %s296, %s285, 64, 64, 4
        $region32: #{tpu_custom_call.1} parent=15 // pred_fallthru
          _
        // Predicated region
        $region33: #{tpu_custom_call.1} parent=15 // pred_check
          %p302 = pneg %p156
        $region34: #{tpu_custom_call.1} parent=15 // pred_check_branch
          %304 = sbr.rel (%p302) target = $region36
        $region35: #{tpu_custom_call.1} parent=15 // pred_region
          %p305 = scmp.lt.s32.totalorder %s27, 5
          %s306 = scalar_select %p305, %s27, 5
          %s307 = scalar_lea.vmem %s4, %s306
        $region36: #{tpu_custom_call.1} parent=15 // pred_fallthru
          _
      $region16: #{tpu_custom_call.1} parent=5 // pred_fallthru
        _
      %p308 = scmp.le.s32.totalorder 1, %s20
      %p309 = scmp.lt.s32.totalorder %s20, 25
      %p310 = pnand %p308, %p309
      %p311 = pneg %p310
      // Predicated region
      $region37: #{tpu_custom_call.1} parent=5 // pred_check
        _
      $region38: #{tpu_custom_call.1} parent=5 // pred_check_branch
        %313 = sbr.rel (%p310) target = $region40
      $region39: #{tpu_custom_call.1} parent=5 // pred_region
        %s314 = ssub.s32 %s20, 1
        %s315 = sand.u32 %s45, 1
        %s316 = scalar_lea.sflag [#allocation4], %s315
        %s317 = sand.u32 %s45, 1
        %s318 = smul.addr %s317, 32
        %s319 = scalar_lea.vmem [#allocation3], %s318
        // Predicated region
        $region41: #{tpu_custom_call.1} parent=39 // pred_check
          %p320 = pneg %p58
        $region42: #{tpu_custom_call.1} parent=39 // pred_check_branch
          %322 = sbr.rel (%p320) target = $region44
        $region43: #{tpu_custom_call.1} parent=39 // pred_region
          %323 = dma.done %s316, 512
        $region44: #{tpu_custom_call.1} parent=39 // pred_fallthru
          _
        %s324 = sand.u32 %s25, 1
        %s325 = scalar_lea.sflag [#allocation7], %s324
        %s326 = sand.u32 %s71, 1
        %s327 = smul.addr %s326, 128
        %s328 = scalar_lea.vmem [#allocation6], %s327
        // Predicated region
        $region45: #{tpu_custom_call.1} parent=39 // pred_check
          %p329 = pneg %p84
        $region46: #{tpu_custom_call.1} parent=39 // pred_check_branch
          %331 = sbr.rel (%p329) target = $region48
        $region47: #{tpu_custom_call.1} parent=39 // pred_region
          %332 = dma.done %s325, 2048
        $region48: #{tpu_custom_call.1} parent=39 // pred_fallthru
          _
        %s333 = sand.u32 %s25, 1
        %s334 = scalar_lea.sflag [#allocation7], %s333
        %s335 = sand.u32 %s123, 1
        %s336 = smul.addr %s335, 64
        %s337 = scalar_lea.vmem [#allocation8], %s336
        // Predicated region
        $region49: #{tpu_custom_call.1} parent=39 // pred_check
          %p338 = pneg %p136
        $region50: #{tpu_custom_call.1} parent=39 // pred_check_branch
          %340 = sbr.rel (%p338) target = $region52
        $region51: #{tpu_custom_call.1} parent=39 // pred_region
          %341 = dma.done %s334, 1024
        $region52: #{tpu_custom_call.1} parent=39 // pred_fallthru
          _
        %s342 = sand.u32 %s45, 1
        %s343 = scalar_lea.sflag [#allocation4], %s342
        %s344 = sand.u32 %s45, 1
        %s345 = smul.addr %s344, 32
        %s346 = scalar_lea.vmem [#allocation3], %s345
        %p347 = pneg %p58
        %p348 = pneg %p55
        %s349 = sand.u32 %s25, 1
        %s350 = scalar_lea.sflag [#allocation7], %s349
        %s351 = sand.u32 %s71, 1
        %s352 = smul.addr %s351, 128
        %s353 = scalar_lea.vmem [#allocation6], %s352
        %p354 = pneg %p84
        %p355 = pneg %p81
        %p356 = scmp.lt.s32.totalorder %s29, 5
        %s357 = scalar_select %p356, %s29, 5
        %s358 = scalar_lea.vmem %s2, %s357
        %p359 = pneg %p110
        %p360 = pneg %p107
        %s361 = sand.u32 %s25, 1
        %s362 = scalar_lea.sflag [#allocation7], %s361
        %s363 = sand.u32 %s123, 1
        %s364 = smul.addr %s363, 64
        %s365 = scalar_lea.vmem [#allocation8], %s364
        %p366 = pneg %p136
        %p367 = pneg %p133
        %p368 = scmp.lt.s32.totalorder %s29, 5
        %s369 = scalar_select %p368, %s29, 5
        %s370 = scalar_lea.vmem %s4, %s369
        %p371 = pneg %p162
        %p372 = pneg %p159
        %p373 = pneg %p188
        %p374 = pneg %p185
        %s375 = sand.u32 %s175, 1
        %s376 = scalar_lea.sflag [#allocation5], %s375
        %s377 = sand.u32 %s175, 1
        %s378 = smul.addr %s377, 2
        %s379 = scalar_lea.vmem [#allocation9], %s378
        %s380 = smul.u32 2, %s30
        %p381 = scmp.lt.s32.totalorder %s29, 5
        %s382 = scalar_select %p381, %s29, 5
        %s383 = scalar_lea.vmem %s2, %s382
        %p384 = scmp.lt.s32.totalorder %s29, 5
        %s385 = scalar_select %p384, %s29, 5
        %s386 = scalar_lea.vmem %s4, %s385
        %p388 = scmp.eq.s32.totalorder %s30, 0
        // Predicated region
        $region53: #{tpu_custom_call.1} parent=39 // pred_check
          %p389 = pneg %p388
        $region54: #{tpu_custom_call.1} parent=39 // pred_check_branch
          %391 = sbr.rel (%p389) target = $region56
        $region55: #{tpu_custom_call.1} parent=39 // pred_region
          %392 = vst [vmem:[#allocation2] sm:$0x3] -inf
        $region56: #{tpu_custom_call.1} parent=39 // pred_fallthru
          _
        %v393 = vld [vmem:[%s319] sm:$0xff]
        %v394 = vld [vmem:[%s319 + $0x8] sm:$0xff]
        %v395 = vld [vmem:[%s319 + $0x10] sm:$0xff]
        %v396 = vld [vmem:[%s319 + $0x18] sm:$0xff]
        %v397 = vld [vmem:[%s328] sm:$0xf]
        %v398 = vld [vmem:[%s328 + $0x4] sm:$0xf]
        %v399 = vld [vmem:[%s328 + $0x8] sm:$0xf]
        %v400 = vld [vmem:[%s328 + $0xc] sm:$0xf]
        %v401 = vld [vmem:[%s328 + $0x10] sm:$0xf]
        %v402 = vld [vmem:[%s328 + $0x14] sm:$0xf]
        %v403 = vld [vmem:[%s328 + $0x18] sm:$0xf]
        %v404 = vld [vmem:[%s328 + $0x1c] sm:$0xf]
        %v405 = vld [vmem:[%s328 + $0x20] sm:$0xf]
        %v406 = vld [vmem:[%s328 + $0x24] sm:$0xf]
        %v407 = vld [vmem:[%s328 + $0x28] sm:$0xf]
        %v408 = vld [vmem:[%s328 + $0x2c] sm:$0xf]
        %v409 = vld [vmem:[%s328 + $0x30] sm:$0xf]
        %v410 = vld [vmem:[%s328 + $0x34] sm:$0xf]
        %v411 = vld [vmem:[%s328 + $0x38] sm:$0xf]
        %v412 = vld [vmem:[%s328 + $0x3c] sm:$0xf]
        %v413 = vld [vmem:[%s328 + $0x40] sm:$0xf]
        %v414 = vld [vmem:[%s328 + $0x44] sm:$0xf]
        %v415 = vld [vmem:[%s328 + $0x48] sm:$0xf]
        %v416 = vld [vmem:[%s328 + $0x4c] sm:$0xf]
        %v417 = vld [vmem:[%s328 + $0x50] sm:$0xf]
        %v418 = vld [vmem:[%s328 + $0x54] sm:$0xf]
        %v419 = vld [vmem:[%s328 + $0x58] sm:$0xf]
        %v420 = vld [vmem:[%s328 + $0x5c] sm:$0xf]
        %v421 = vld [vmem:[%s328 + $0x60] sm:$0xf]
        %v422 = vld [vmem:[%s328 + $0x64] sm:$0xf]
        %v423 = vld [vmem:[%s328 + $0x68] sm:$0xf]
        %v424 = vld [vmem:[%s328 + $0x6c] sm:$0xf]
        %v425 = vld [vmem:[%s328 + $0x70] sm:$0xf]
        %v426 = vld [vmem:[%s328 + $0x74] sm:$0xf]
        %v427 = vld [vmem:[%s328 + $0x78] sm:$0xf]
        %v428 = vld [vmem:[%s328 + $0x7c] sm:$0xf]
        %v429 = vld [vmem:[%s383] sm:$0x1]
        %v431 = vlaneseq
        %v432 = vshrl.u32 %v431, 7
        %v433 = vsub.s32 0, %v432
        %v434 = vrot.slane %v429, %v433
        %v440 = vunpack.c.l.b16 %v393
        %v441 = vunpack.c.h.b16 %v393
        %v442 = vunpack.c.l.b16 %v394
        %v443 = vunpack.c.h.b16 %v394
        %v444 = vunpack.c.l.b16 %v395
        %v445 = vunpack.c.h.b16 %v395
        %v446 = vunpack.c.l.b16 %v396
        %v447 = vunpack.c.h.b16 %v396
        %v448 = vpack.c.b16 %v442, %v440
        %v449 = vpack.c.b16 %v443, %v441
        %v450 = vpack.c.b16 %v446, %v444
        %v451 = vpack.c.b16 %v447, %v445
        %v488 = vunpack.c.l.b16 %v397
        %v489 = vunpack.c.l.b16 %v398
        %v490 = vunpack.c.l.b16 %v399
        %v491 = vunpack.c.l.b16 %v400
        %v492 = vunpack.c.l.b16 %v401
        %v493 = vunpack.c.l.b16 %v402
        %v494 = vunpack.c.l.b16 %v403
        %v495 = vunpack.c.l.b16 %v404
        %v496 = vunpack.c.l.b16 %v405
        %v497 = vunpack.c.l.b16 %v406
        %v498 = vunpack.c.l.b16 %v407
        %v499 = vunpack.c.l.b16 %v408
        %v500 = vunpack.c.l.b16 %v409
        %v501 = vunpack.c.l.b16 %v410
        %v502 = vunpack.c.l.b16 %v411
        %v503 = vunpack.c.l.b16 %v412
        %v504 = vunpack.c.l.b16 %v413
        %v505 = vunpack.c.l.b16 %v414
        %v506 = vunpack.c.l.b16 %v415
        %v507 = vunpack.c.l.b16 %v416
        %v508 = vunpack.c.l.b16 %v417
        %v509 = vunpack.c.l.b16 %v418
        %v510 = vunpack.c.l.b16 %v419
        %v511 = vunpack.c.l.b16 %v420
        %v512 = vunpack.c.l.b16 %v421
        %v513 = vunpack.c.l.b16 %v422
        %v514 = vunpack.c.l.b16 %v423
        %v515 = vunpack.c.l.b16 %v424
        %v516 = vunpack.c.l.b16 %v425
        %v517 = vunpack.c.l.b16 %v426
        %v518 = vunpack.c.l.b16 %v427
        %v519 = vunpack.c.l.b16 %v428
        %v520 = vpack.c.b16 %v489, %v488
        %v521 = vpack.c.b16 %v491, %v490
        %v522 = vpack.c.b16 %v493, %v492
        %v523 = vpack.c.b16 %v495, %v494
        %v524 = vpack.c.b16 %v497, %v496
        %v525 = vpack.c.b16 %v499, %v498
        %v526 = vpack.c.b16 %v501, %v500
        %v527 = vpack.c.b16 %v503, %v502
        %v528 = vpack.c.b16 %v505, %v504
        %v529 = vpack.c.b16 %v507, %v506
        %v530 = vpack.c.b16 %v509, %v508
        %v531 = vpack.c.b16 %v511, %v510
        %v532 = vpack.c.b16 %v513, %v512
        %v533 = vpack.c.b16 %v515, %v514
        %v534 = vpack.c.b16 %v517, %v516
        %v535 = vpack.c.b16 %v519, %v518
        %552 = vmatprep.subr.bf16.mxu0 0
        %553 = vmatpush1.bf16.msra.mxu0 %v520
        %554 = vmatprep.subr.bf16.mxu0 0
        %555 = vmatpush1.bf16.msra.mxu0 %v521
        %556 = vmatprep.subr.bf16.mxu0 0
        %557 = vmatpush1.bf16.msra.mxu0 %v522
        %558 = vmatprep.subr.bf16.mxu0 0
        %559 = vmatpush1.bf16.msra.mxu0 %v523
        %560 = vmatprep.subr.bf16.mxu0 0
        %561 = vmatpush1.bf16.msra.mxu0 %v524
        %562 = vmatprep.subr.bf16.mxu0 0
        %563 = vmatpush1.bf16.msra.mxu0 %v525
        %564 = vmatprep.subr.bf16.mxu0 0
        %565 = vmatpush1.bf16.msra.mxu0 %v526
        %566 = vmatprep.subr.bf16.mxu0 0
        %567 = vmatpush1.bf16.msra.mxu0 %v527
        %568 = vmatprep.subr.bf16.mxu0 0
        %569 = vmatpush1.bf16.msra.mxu0 %v528
        %570 = vmatprep.subr.bf16.mxu0 0
        %571 = vmatpush1.bf16.msra.mxu0 %v529
        %572 = vmatprep.subr.bf16.mxu0 0
        %573 = vmatpush1.bf16.msra.mxu0 %v530
        %574 = vmatprep.subr.bf16.mxu0 0
        %575 = vmatpush1.bf16.msra.mxu0 %v531
        %576 = vmatprep.subr.bf16.mxu0 0
        %577 = vmatpush1.bf16.msra.mxu0 %v532
        %578 = vmatprep.subr.bf16.mxu0 0
        %579 = vmatpush1.bf16.msra.mxu0 %v533
        %580 = vmatprep.subr.bf16.mxu0 0
        %581 = vmatpush1.bf16.msra.mxu0 %v534
        %582 = vmatprep.subr.bf16.mxu0 0
        %583 = vmatpush1.bf16.msra.mxu0 %v535
        %584 = vmatprep.mubr.bf16.mxu0 %v449
        %585 = vmatmul.mubr.bf16.gmra.mrb[0].mxu0 %v448
        %v586 = vpop.f32.mrb[0].mxu0
        %v587 = vadd.f32 %v434, %v586
        %v588 = vpop.f32.mrb[0].mxu0
        %v589 = vpop.f32.mrb[0].mxu0
        %v590 = vadd.f32 %v434, %v589
        %v591 = vpop.f32.mrb[0].mxu0
        %592 = vmatprep.mubr.bf16.mxu0 %v451
        %593 = vmatmul.mubr.bf16.gmra.mrb[0].mxu0 %v450
        %v594 = vpop.f32.mrb[0].mxu0
        %v595 = vadd.f32 %v434, %v594
        %v596 = vpop.f32.mrb[0].mxu0
        %v597 = vpop.f32.mrb[0].mxu0
        %v598 = vadd.f32 %v434, %v597
        %v599 = vpop.f32.mrb[0].mxu0
        %600 = vdwg.mxu0
        %v601 = vmax.f32 %v587, 0.0
        %v602 = vmax.f32 %v590, 0.0
        %v603 = vmax.f32 %v595, 0.0
        %v604 = vmax.f32 %v598, 0.0
        %v605 = vmax.f32 %v601, %v602
        %v606 = vrot.slane %v605, 4
        %v607 = vmax.f32 %v605, %v606
        %v608 = vrot.slane %v607, 2
        %v609 = vmax.f32 %v607, %v608
        %v610 = vrot.slane %v609, 1
        %v611 = vmax.f32 %v609, %v610
        %v612 = vmax.f32 %v603, %v604
        %v613 = vrot.slane %v612, 4
        %v614 = vmax.f32 %v612, %v613
        %v615 = vrot.slane %v614, 2
        %v616 = vmax.f32 %v614, %v615
        %v617 = vrot.slane %v616, 1
        %v618 = vmax.f32 %v616, %v617
        %v619 = vld [vmem:[#allocation2] sm:$0x3]
        %vm622 = vcmask 1041409
        %v623 = vsel %vm622, %v618, %v611
        %v625 = vmax.f32 %v619, %v623
        %626 = vst [vmem:[#allocation2] sm:$0x3] %v625
        %p627 = scmp.eq.s32.totalorder %s30, 3
        // Predicated region
        $region57: #{tpu_custom_call.1} parent=39 // pred_check
          %p628 = pneg %p627
        $region58: #{tpu_custom_call.1} parent=39 // pred_check_branch
          %630 = sbr.rel (%p628) target = $region60
        $region59: #{tpu_custom_call.1} parent=39 // pred_region
          %v631 = vld [vmem:[#allocation2] sm:$0x3]
          %v632 = vpack.c.bf16 %v631, %v631
          %v633 = vld [vmem:[%s337] sm:$0xf]
          %v634 = vld [vmem:[%s337 + $0x4] sm:$0xf]
          %v635 = vld [vmem:[%s337 + $0x8] sm:$0xf]
          %v636 = vld [vmem:[%s337 + $0xc] sm:$0xf]
          %v637 = vld [vmem:[%s337 + $0x10] sm:$0xf]
          %v638 = vld [vmem:[%s337 + $0x14] sm:$0xf]
          %v639 = vld [vmem:[%s337 + $0x18] sm:$0xf]
          %v640 = vld [vmem:[%s337 + $0x1c] sm:$0xf]
          %v641 = vld [vmem:[%s337 + $0x20] sm:$0xf]
          %v642 = vld [vmem:[%s337 + $0x24] sm:$0xf]
          %v643 = vld [vmem:[%s337 + $0x28] sm:$0xf]
          %v644 = vld [vmem:[%s337 + $0x2c] sm:$0xf]
          %v645 = vld [vmem:[%s337 + $0x30] sm:$0xf]
          %v646 = vld [vmem:[%s337 + $0x34] sm:$0xf]
          %v647 = vld [vmem:[%s337 + $0x38] sm:$0xf]
          %v648 = vld [vmem:[%s337 + $0x3c] sm:$0xf]
          %v649 = vld [vmem:[%s386] sm:$0x1]
          %v651 = vlaneseq
          %v652 = vshrl.u32 %v651, 7
          %v653 = vsub.s32 0, %v652
          %v654 = vrot.slane %v649, %v653
          %v672 = vunpack.c.l.b16 %v633
          %v673 = vunpack.c.l.b16 %v634
          %v674 = vunpack.c.l.b16 %v635
          %v675 = vunpack.c.l.b16 %v636
          %v676 = vunpack.c.l.b16 %v637
          %v677 = vunpack.c.l.b16 %v638
          %v678 = vunpack.c.l.b16 %v639
          %v679 = vunpack.c.l.b16 %v640
          %v680 = vunpack.c.l.b16 %v641
          %v681 = vunpack.c.l.b16 %v642
          %v682 = vunpack.c.l.b16 %v643
          %v683 = vunpack.c.l.b16 %v644
          %v684 = vunpack.c.l.b16 %v645
          %v685 = vunpack.c.l.b16 %v646
          %v686 = vunpack.c.l.b16 %v647
          %v687 = vunpack.c.l.b16 %v648
          %v688 = vpack.c.b16 %v673, %v672
          %v689 = vpack.c.b16 %v675, %v674
          %v690 = vpack.c.b16 %v677, %v676
          %v691 = vpack.c.b16 %v679, %v678
          %v692 = vpack.c.b16 %v681, %v680
          %v693 = vpack.c.b16 %v683, %v682
          %v694 = vpack.c.b16 %v685, %v684
          %v695 = vpack.c.b16 %v687, %v686
          %704 = vmatprep.subr.bf16.mxu0 0
          %705 = vmatpush1.bf16.msra.mxu0 %v688
          %706 = vmatprep.subr.bf16.mxu0 0
          %707 = vmatpush1.bf16.msra.mxu0 %v689
          %708 = vmatprep.subr.bf16.mxu0 0
          %709 = vmatpush1.bf16.msra.mxu0 %v690
          %710 = vmatprep.subr.bf16.mxu0 0
          %711 = vmatpush1.bf16.msra.mxu0 %v691
          %712 = vmatprep.subr.bf16.mxu0 0
          %713 = vmatpush1.bf16.msra.mxu0 %v692
          %714 = vmatprep.subr.bf16.mxu0 0
          %715 = vmatpush1.bf16.msra.mxu0 %v693
          %716 = vmatprep.subr.bf16.mxu0 0
          %717 = vmatpush1.bf16.msra.mxu0 %v694
          %718 = vmatprep.subr.bf16.mxu0 0
          %719 = vmatpush1.bf16.msra.mxu0 %v695
          %720 = vmatprep.subr.bf16.mxu0 0
          %721 = vmatpush1.bf16.msra.mxu0 0
          %722 = vmatprep.subr.bf16.mxu0 0
          %723 = vmatpush1.bf16.msra.mxu0 0
          %724 = vmatprep.subr.bf16.mxu0 0
          %725 = vmatpush1.bf16.msra.mxu0 0
          %726 = vmatprep.subr.bf16.mxu0 0
          %727 = vmatpush1.bf16.msra.mxu0 0
          %728 = vmatprep.subr.bf16.mxu0 0
          %729 = vmatpush1.bf16.msra.mxu0 0
          %730 = vmatprep.subr.bf16.mxu0 0
          %731 = vmatpush1.bf16.msra.mxu0 0
          %732 = vmatprep.subr.bf16.mxu0 0
          %733 = vmatpush1.bf16.msra.mxu0 0
          %734 = vmatprep.subr.bf16.mxu0 0
          %735 = vmatpush1.bf16.msra.mxu0 0
          %736 = vmatprep.mubr.bf16.mxu0 0
          %737 = vmatmul.mubr.bf16.gmra.mrb[0].mxu0 %v632
          %v738 = vpop.f32.mrb[0].mxu0
          %v739 = vadd.f32 %v654, %v738
          %v740 = vpop.f32.mrb[0].mxu0
          %v741 = vpop.f32.mrb[0].mxu0
          %v742 = vpop.f32.mrb[0].mxu0
          %743 = vdwg.mxu0
          %v744 = vmax.f32 %v739, 0.0
          %745 = vst [vmem:[%s379] sm:$0x3] %v744
        $region60: #{tpu_custom_call.1} parent=39 // pred_fallthru
          _
        %s746 = sand.u32 %s175, 1
        %s747 = scalar_lea.sflag [#allocation5], %s746
        %s748 = sand.u32 %s175, 1
        %s749 = smul.addr %s748, 2
        %s750 = scalar_lea.vmem [#allocation9], %s749
        // Predicated region
        $region61: #{tpu_custom_call.1} parent=39 // pred_check
          %p751 = pneg %p185
        $region62: #{tpu_custom_call.1} parent=39 // pred_check_branch
          %753 = sbr.rel (%p751) target = $region64
        $region63: #{tpu_custom_call.1} parent=39 // pred_region
          %s755 = ssub.s32 32, 32
          %756 = vsyncadd %s747, %s755
          %s757 = smul.addr %s29, 32
          %s758 = scalar_lea.hbm %s5, %s757
          %s760 = sshll.u32 %s750, 4
          %s761 = int_to_ptr.vmem [resolvable:$true] %s760
          %763 = dma.vmem_to_hbm [thread:$0]  %s761, 32, %s758, %s747
        $region64: #{tpu_custom_call.1} parent=39 // pred_fallthru
          _
      $region40: #{tpu_custom_call.1} parent=5 // pred_fallthru
        _
      %p764 = scmp.le.s32.totalorder 2, %s20
      // Predicated region
      $region65: #{tpu_custom_call.1} parent=5 // pred_check
        %p765 = pneg %p764
      $region66: #{tpu_custom_call.1} parent=5 // pred_check_branch
        %767 = sbr.rel (%p765) target = $region68
      $region67: #{tpu_custom_call.1} parent=5 // pred_region
        %s768 = ssub.s32 %s20, 2
        // Predicated region
        $region69: #{tpu_custom_call.1} parent=67 // pred_check
          %p769 = pneg %p191
        $region70: #{tpu_custom_call.1} parent=67 // pred_check_branch
          %771 = sbr.rel (%p769) target = $region72
        $region71: #{tpu_custom_call.1} parent=67 // pred_region
          %s772 = sand.u32 %s176, 1
          %s773 = scalar_lea.sflag [#allocation5], %s772
          %s774 = sand.u32 %s176, 1
          %s775 = smul.addr %s774, 2
          %s776 = scalar_lea.vmem [#allocation9], %s775
          %777 = dma.done %s773, 32
        $region72: #{tpu_custom_call.1} parent=67 // pred_fallthru
          _
      $region68: #{tpu_custom_call.1} parent=5 // pred_fallthru
        _
    $region6: #{tpu_custom_call.1} parent=1 // loop_footer
      %s24 = sadd.s32 1, %s20
    $region7: #{tpu_custom_call.1} parent=1 // loop_footer_branch
      %19 = sbr.rel target = $region3
    $region8: #{tpu_custom_call.1} parent=1 // loop_exit
      _
    %778 = vsyncpa [#allocation4], 1
    %s779 = scalar_lea.sflag [#allocation4], 1
    %780 = vsyncpa %s779, 1
    %781 = vsyncpa [#allocation7], 1
    %s782 = scalar_lea.sflag [#allocation7], 1
    %783 = vsyncpa %s782, 1
    %784 = vsyncpa [#allocation5], 1
    %s785 = scalar_lea.sflag [#allocation5], 1
    %786 = vsyncpa %s785, 1

</llo_original>
